<compile_context>
chip_gen: v5e
topology: v5e:2x2
jax: 0.10.0
libtpu: 0.0.40
codegen_flags: <defaults>
</compile_context>

<pallas_src>
import functools

import jax
import jax.numpy as jnp
from jax.experimental import pallas as pl
from jax.experimental.pallas import tpu as pltpu

BN_EPS = 1e-5
_P1_CORES = 2   # phase-1 batch-reduction slices (v7x has 2 TCs; harmless elsewhere)


def _round_up(x, m):
    return ((x + m - 1) // m) * m


def _plan_tiles(batch, max_batch_tile):
    """128-aligned batch tile + padded batch so the tile count splits over _P1_CORES."""
    max_batch_tile = _round_up(max(max_batch_tile, 128), 128)
    per_core = (batch + _P1_CORES - 1) // _P1_CORES
    tb = min(max_batch_tile, _round_up(max(per_core, 1), 128))
    bp = _round_up(batch, _P1_CORES * tb)
    return tb, bp


# --------------------------------------------------------------------------
# Phase 1: Linear(input_dim, H) + ReLU; per-core partial BN statistics.
# Layout: batch on the lane axis -> h1 is (H, tb).
# --------------------------------------------------------------------------
def _phase1_kernel(xt_ref, w1t_ref, small_ref, stats_ref, *, true_batch, needs_mask):
    c = pl.program_id(0)          # phase-1 batch slice ("core")
    i = pl.program_id(1)          # batch tile within this slice

    # MXU matmul (bf16 operands on the fast path), f32 accumulation.
    h1 = jnp.dot(w1t_ref[...], xt_ref[...], preferred_element_type=jnp.float32)
    h1 = jnp.maximum(h1 + small_ref[:, 0:1], 0.0)            # pack col 0 = b1

    if needs_mask:
        # Zero the padded batch columns (padded x rows give h1 = relu(b1) != 0).
        tb = xt_ref.shape[1]
        col0 = (c * pl.num_programs(1) + i) * tb
        cols = col0 + jax.lax.broadcasted_iota(jnp.int32, (1, tb), 1)
        h1 = jnp.where(cols < true_batch, h1, 0.0)

    # Single (H, 2) resident-block update: col 0 = sum, col 1 = sum of squares.
    sums = jnp.concatenate(
        [jnp.sum(h1, axis=1, keepdims=True),
         jnp.sum(h1 * h1, axis=1, keepdims=True)],
        axis=1)

    @pl.when(i == 0)
    def _():
        stats_ref[...] = jnp.zeros_like(stats_ref)

    stats_ref[...] = stats_ref[...] + sums


# --------------------------------------------------------------------------
# Phase 2: recompute Linear1 + ReLU (h1 never touches HBM), BatchNorm
# (gamma/beta pre-folded into Linear2), Linear2 + ReLU, Linear3 + Tanh.
# Output is a lane-dense (1, tb) tile.
# --------------------------------------------------------------------------
def _phase2_kernel(xt_ref, w1t_ref, w2t_ref, small_ref, stats_ref, o_ref, *, inv_n):
    hidden = w2t_ref.shape[0]

    # Combine per-core partial statistics -> full-batch mean / biased variance.
    stats = stats_ref[...]                                    # (_P1_CORES*H, 2)
    ssum = stats[0:hidden, :]
    for c in range(1, stats.shape[0] // hidden):
        ssum = ssum + stats[c * hidden:(c + 1) * hidden, :]
    mean = ssum[:, 0:1] * inv_n                               # (H, 1)
    var = jnp.maximum(ssum[:, 1:2] * inv_n - mean * mean, 0.0)
    scale = jax.lax.rsqrt(var + BN_EPS)                       # EUP rsqrt

    # Recompute Linear1 + ReLU from x (cheaper than re-reading h1 from HBM).
    h1 = jnp.dot(w1t_ref[...], xt_ref[...], preferred_element_type=jnp.float32)
    h1 = jnp.maximum(h1 + small_ref[:, 0:1], 0.0)             # (H, tb) f32

    # BatchNorm: gamma/beta already folded into w2t/b2f at prep time; mean and
    # scale broadcast along lanes -> 2 VPU ops per vreg, hidden under the MXU.
    h1n = ((h1 - mean) * scale).astype(w2t_ref.dtype)

    # Linear2 + ReLU.
    h2 = jnp.dot(w2t_ref[...], h1n, preferred_element_type=jnp.float32)
    h2 = jnp.maximum(h2 + small_ref[:, 1:2], 0.0)             # col 1 = folded b2

    # Linear(H, 1) as a weighted sublane reduction (VPU/XLU; no transposes,
    # keeps the MXU free and the (1, tb) output store full-width).
    out = jnp.sum(h2 * small_ref[:, 2:3], axis=0, keepdims=True)   # col 2 = w3
    o_ref[...] = jnp.tanh(out + small_ref[0:1, 3:4])               # col 3 = b3


def sizing_adjustment_net(x, params, *, matmul_dtype=jnp.bfloat16,
                          max_batch_tile=4096):
    """Full forward pass in two Pallas calls (training-mode BatchNorm stats)."""
    w1, b1, gamma, beta, w2, b2, w3, b3 = params
    batch, in_dim = x.shape
    hidden = w1.shape[1]
    assert hidden % 8 == 0, "hidden_dim must be a multiple of 8"

    # ---- one-time static parameter prep (transposed / batch-on-lanes) -------
    w1t = w1.T.astype(matmul_dtype)                           # (H, D)
    # Fold BN affine into Linear2: (g*z + be) @ W2 + b2
    #                            =  z @ (g[:,None]*W2) + (be @ W2 + b2)
    w2t = (gamma[:, None] * w2).T.astype(matmul_dtype)        # (H_out, H_in)
    b2f = beta @ w2 + b2
    # Pack all small per-feature params into one (H, 4) f32 block -> one DMA.
    small = jnp.stack(
        [b1, b2f, w3.reshape(-1), jnp.broadcast_to(b3, (hidden,))],
        axis=1).astype(jnp.float32)

    tb, bp = _plan_tiles(batch, max_batch_tile)
    nb = bp // tb
    nb_half = nb // _P1_CORES

    # x in transposed (D, Bp) layout, zero-padded along the batch axis.
    x_m = x.astype(matmul_dtype)
    if bp != batch:
        x_m = jnp.pad(x_m, ((0, bp - batch), (0, 0)))
    x_t = x_m.T                                               # (D, Bp)

    itemsize = jnp.dtype(matmul_dtype).itemsize
    block_bytes = 2 * (in_dim * tb * itemsize + hidden * in_dim * itemsize
                       + hidden * hidden * itemsize + hidden * 4 * 4
                       + _P1_CORES * hidden * 2 * 4 + tb * 4)
    vmem_limit = int(min(max(block_bytes + 16 * hidden * tb * 4 + (8 << 20),
                             20 << 20), 48 << 20))

    mm1_flops = 2 * bp * in_dim * hidden
    mm2_flops = 2 * bp * hidden * hidden
    weight_bytes = (hidden * in_dim + hidden * hidden) * itemsize \
        + hidden * 4 * 4 + _P1_CORES * hidden * 2 * 4
    x_bytes = bp * in_dim * itemsize

    # ---- phase 1: Linear1 + ReLU, per-core partial sum / sum-of-squares -----
    stats = pl.pallas_call(
        functools.partial(_phase1_kernel, true_batch=batch,
                          needs_mask=(bp != batch)),
        grid=(_P1_CORES, nb_half),
        in_specs=[
            pl.BlockSpec((in_dim, tb),
                         lambda c, i, nh=nb_half: (0, c * nh + i)),
            pl.BlockSpec((hidden, in_dim), lambda c, i: (0, 0)),
            pl.BlockSpec((hidden, 4), lambda c, i: (0, 0)),
        ],
        out_specs=pl.BlockSpec((hidden, 2), lambda c, i: (c, 0)),
        out_shape=jax.ShapeDtypeStruct((_P1_CORES * hidden, 2), jnp.float32),
        compiler_params=pltpu.CompilerParams(
            dimension_semantics=("parallel", "arbitrary"),
            vmem_limit_bytes=vmem_limit),
        cost_estimate=pl.CostEstimate(
            flops=mm1_flops + 4 * bp * hidden,
            transcendentals=0,
            bytes_accessed=x_bytes + weight_bytes),
    )(x_t, w1t, small)

    # ---- phase 2: recompute L1 + BN + Linear2 + ReLU + Linear3 + Tanh -------
    out_row = pl.pallas_call(
        functools.partial(_phase2_kernel, inv_n=1.0 / batch),
        grid=(nb,),
        in_specs=[
            pl.BlockSpec((in_dim, tb), lambda i: (0, i)),
            pl.BlockSpec((hidden, in_dim), lambda i: (0, 0)),
            pl.BlockSpec((hidden, hidden), lambda i: (0, 0)),
            pl.BlockSpec((hidden, 4), lambda i: (0, 0)),
            pl.BlockSpec((_P1_CORES * hidden, 2), lambda i: (0, 0)),
        ],
        out_specs=pl.BlockSpec((1, tb), lambda i: (0, i)),
        out_shape=jax.ShapeDtypeStruct((1, bp), jnp.float32),
        compiler_params=pltpu.CompilerParams(
            dimension_semantics=("parallel",),    # megacore across batch tiles
            vmem_limit_bytes=vmem_limit),
        cost_estimate=pl.CostEstimate(
            flops=mm1_flops + mm2_flops + 10 * bp * hidden,
            transcendentals=bp,
            bytes_accessed=x_bytes + weight_bytes + bp * 4),
    )(x_t, w1t, w2t, small, stats)

    return out_row[0, :batch].reshape(batch, 1)


def init_params(key, input_dim, hidden_dim=64):
    """Deterministic synthetic params (same shapes/semantics as the PyTorch module)."""
    ks = jax.random.split(key, 8)
    w1 = jax.random.normal(ks[0], (input_dim, hidden_dim), jnp.float32) * 0.1
    b1 = jax.random.normal(ks[1], (hidden_dim,), jnp.float32) * 0.01
    gamma = 1.0 + 0.1 * jax.random.normal(ks[2], (hidden_dim,), jnp.float32)
    beta = 0.1 * jax.random.normal(ks[3], (hidden_dim,), jnp.float32)
    w2 = jax.random.normal(ks[4], (hidden_dim, hidden_dim), jnp.float32) * 0.1
    b2 = jax.random.normal(ks[5], (hidden_dim,), jnp.float32) * 0.01
    w3 = jax.random.normal(ks[6], (hidden_dim, 1), jnp.float32) * 0.1
    b3 = jax.random.normal(ks[7], (), jnp.float32) * 0.01
    return (w1, b1, gamma, beta, w2, b2, w3, b3)


def _reference(x, params):
    """Pure-JAX reference (un-folded form) for numerical checks."""
    w1, b1, gamma, beta, w2, b2, w3, b3 = params
    h1 = jnp.maximum(x @ w1 + b1, 0.0)
    mean = jnp.mean(h1, axis=0, keepdims=True)
    var = jnp.mean((h1 - mean) ** 2, axis=0, keepdims=True)   # biased, training mode
    bn = gamma * (h1 - mean) / jnp.sqrt(var + BN_EPS) + beta
    h2 = jnp.maximum(bn @ w2 + b2, 0.0)
    return jnp.tanh(h2 @ w3 + b3)


if __name__ == "__main__":
    key = jax.random.PRNGKey(0)
    kx, kp, kx2 = jax.random.split(key, 3)

    input_dim, hidden_dim = 16, 64
    params = init_params(kp, input_dim, hidden_dim)

    # Small batch: exact f32-operand path (tight check) and bf16 fast path.
    batch = 8
    x = jax.random.normal(kx, (batch, input_dim), jnp.float32)
    ref = _reference(x, params)

    out_f32 = jax.block_until_ready(
        sizing_adjustment_net(x, params, matmul_dtype=jnp.float32))
    assert out_f32.shape == (batch, 1)
    assert jnp.allclose(out_f32, ref, atol=1e-4, rtol=1e-4)

    out_bf16 = jax.block_until_ready(
        sizing_adjustment_net(x, params, matmul_dtype=jnp.bfloat16))
    assert out_bf16.shape == (batch, 1)
    assert jnp.allclose(out_bf16, ref, atol=5e-2, rtol=5e-2)

    # Non-128-divisible batch: exercises the batch pad + stats-mask path.
    x2 = jax.random.normal(kx2, (200, input_dim), jnp.float32)
    out2 = jax.block_until_ready(
        sizing_adjustment_net(x2, params, matmul_dtype=jnp.float32))
    assert out2.shape == (200, 1)
    assert jnp.allclose(out2, _reference(x2, params), atol=1e-4, rtol=1e-4)

    print("KERNEL_OK")
</pallas_src>

<mosaic_0001>
module attributes {stable_mosaic.version = 11 : i64} {
  func.func @_phase1_kernel(%arg0: i32, %arg1: i32, %arg2: memref<16x128xf32, #tpu.memory_space<vmem>>, %arg3: memref<64x16xf32, #tpu.memory_space<vmem>>, %arg4: memref<64x4xf32, #tpu.memory_space<vmem>>, %arg5: memref<64x2xf32, #tpu.memory_space<vmem>>) attributes {dimension_semantics = [#tpu.dimension_semantics<parallel>, #tpu.dimension_semantics<arbitrary>], iteration_bounds = array<i64: 2, 1>, scalar_prefetch = 0 : i64, scratch_operands = 0 : i64, tpu.core_type = #tpu.core_type<tc>, window_params = [{transform_indices = @transform_0, window_bounds = array<i64: 16, 128>}, {pipeline_mode = #tpu.pipeline_mode<synchronous>, transform_indices = @transform_1, window_bounds = array<i64: 64, 16>}, {pipeline_mode = #tpu.pipeline_mode<synchronous>, transform_indices = @transform_2, window_bounds = array<i64: 64, 4>}, {transform_indices = @transform_3, window_bounds = array<i64: 64, 2>}]} {
    %c0 = arith.constant 0 : index
    %c0_0 = arith.constant 0 : index
    %0 = vector.load %arg3[%c0, %c0_0] : memref<64x16xf32, #tpu.memory_space<vmem>>, vector<64x16xf32>
    %c0_1 = arith.constant 0 : index
    %c0_2 = arith.constant 0 : index
    %1 = vector.load %arg2[%c0_1, %c0_2] : memref<16x128xf32, #tpu.memory_space<vmem>>, vector<16x128xf32>
    %cst = arith.constant dense<0.000000e+00> : vector<64x128xf32>
    %2 = tpu.matmul %0, %1, %cst {dimension_numbers = #tpu.dot_dimension_numbers<[1], [0], [0], [1], [0, 0, 1, 1], [], []>} : vector<64x16xf32>, vector<16x128xf32>, vector<64x128xf32> -> vector<64x128xf32>
    %c0_3 = arith.constant 0 : index
    %c0_4 = arith.constant 0 : index
    %3 = vector.load %arg4[%c0_3, %c0_4] : memref<64x4xf32, #tpu.memory_space<vmem>>, vector<64x1xf32>
    %4 = vector.broadcast %3 : vector<64x1xf32> to vector<64x128xf32>
    %5 = arith.addf %2, %4 : vector<64x128xf32>
    %cst_5 = arith.constant 0.000000e+00 : f32
    %6 = vector.broadcast %cst_5 : f32 to vector<64x128xf32>
    %7 = arith.maximumf %5, %6 : vector<64x128xf32>
    %c1_i32 = arith.constant 1 : i32
    %8 = arith.muli %arg0, %c1_i32 : i32
    %9 = arith.addi %8, %arg1 : i32
    %c128_i32 = arith.constant 128 : i32
    %10 = arith.muli %9, %c128_i32 : i32
    %11 = tpu.iota {dimensions = array<i32: 1>} : vector<1x128xi32>
    %12 = vector.broadcast %10 : i32 to vector<1x128xi32>
    %13 = arith.addi %12, %11 : vector<1x128xi32>
    %c8_i32 = arith.constant 8 : i32
    %14 = vector.broadcast %c8_i32 : i32 to vector<1x128xi32>
    %15 = arith.cmpi slt, %13, %14 : vector<1x128xi32>
    %cst_6 = arith.constant 0.000000e+00 : f32
    %16 = vector.shape_cast %15 : vector<1x128xi1> to vector<1x128xi1>
    %17 = vector.broadcast %16 : vector<1x128xi1> to vector<64x128xi1>
    %18 = vector.broadcast %cst_6 : f32 to vector<64x128xf32>
    %19 = arith.select %17, %7, %18 : vector<64x128xi1>, vector<64x128xf32>
    %cst_7 = arith.constant dense<0.000000e+00> : vector<64xf32>
    %20 = vector.multi_reduction <add>, %19, %cst_7 [1] : vector<64x128xf32> to vector<64xf32>
    %21 = vector.shape_cast %20 : vector<64xf32> to vector<64x1xf32>
    %22 = arith.mulf %19, %19 : vector<64x128xf32>
    %cst_8 = arith.constant dense<0.000000e+00> : vector<64xf32>
    %23 = vector.multi_reduction <add>, %22, %cst_8 [1] : vector<64x128xf32> to vector<64xf32>
    %24 = vector.shape_cast %23 : vector<64xf32> to vector<64x1xf32>
    %25 = tpu.concatenate %21, %24 in 1 : vector<64x1xf32>, vector<64x1xf32> -> vector<64x2xf32>
    %c0_i32 = arith.constant 0 : i32
    %26 = arith.cmpi eq, %arg1, %c0_i32 : i32
    %27 = arith.extui %26 : i1 to i32
    %c0_i32_9 = arith.constant 0 : i32
    %28 = arith.cmpi ne, %27, %c0_i32_9 : i32
    scf.if %28 {
      %cst_14 = arith.constant 0.000000e+00 : f32
      %32 = vector.broadcast %cst_14 : f32 to vector<64x2xf32>
      %c0_15 = arith.constant 0 : index
      %c0_16 = arith.constant 0 : index
      %33 = vector.load %arg5[%c0_15, %c0_16] : memref<64x2xf32, #tpu.memory_space<vmem>>, vector<64x2xf32>
      tpu.vector_store %arg5[%c0_15, %c0_16], %32 {strides = array<i32>} : memref<64x2xf32, #tpu.memory_space<vmem>>, vector<64x2xf32>,
    } else {
    }
    %c0_10 = arith.constant 0 : index
    %c0_11 = arith.constant 0 : index
    %29 = vector.load %arg5[%c0_10, %c0_11] : memref<64x2xf32, #tpu.memory_space<vmem>>, vector<64x2xf32>
    %30 = arith.addf %29, %25 : vector<64x2xf32>
    %c0_12 = arith.constant 0 : index
    %c0_13 = arith.constant 0 : index
    %31 = vector.load %arg5[%c0_12, %c0_13] : memref<64x2xf32, #tpu.memory_space<vmem>>, vector<64x2xf32>
    tpu.vector_store %arg5[%c0_12, %c0_13], %30 {strides = array<i32>} : memref<64x2xf32, #tpu.memory_space<vmem>>, vector<64x2xf32>,
    return
  }
  func.func @transform_0(%arg0: i32, %arg1: i32) -> (i32, i32) {
    %c1_i32 = arith.constant 1 : i32
    %0 = arith.muli %arg0, %c1_i32 : i32
    %1 = arith.addi %0, %arg1 : i32
    %c0_i32 = arith.constant 0 : i32
    %c0_i32_0 = arith.constant 0 : i32
    return %c0_i32, %1 : i32, i32
  }
  func.func @transform_1(%arg0: i32, %arg1: i32) -> (i32, i32) {
    %c0_i32 = arith.constant 0 : i32
    %c0_i32_0 = arith.constant 0 : i32
    %c0_i32_1 = arith.constant 0 : i32
    return %c0_i32, %c0_i32_0 : i32, i32
  }
  func.func @transform_2(%arg0: i32, %arg1: i32) -> (i32, i32) {
    %c0_i32 = arith.constant 0 : i32
    %c0_i32_0 = arith.constant 0 : i32
    %c0_i32_1 = arith.constant 0 : i32
    return %c0_i32, %c0_i32_0 : i32, i32
  }
  func.func @transform_3(%arg0: i32, %arg1: i32) -> (i32, i32) {
    %c0_i32 = arith.constant 0 : i32
    %c0_i32_0 = arith.constant 0 : i32
    return %arg0, %c0_i32 : i32, i32
  }
}

</mosaic_0001>

<llo_original>
// kernel: tpu_custom_call.1
$region0: #{tpu_custom_call.1}
  #allocation0 [shape = 'u32[]', space=smem, size = 0x4, offset = 0x4, fixed_abs, tag = 'smem constant byte address 0x4 - core index']
  #allocation1 [shape = 'u32[72,128]{1,0:T(1,128)}', space=vmem, size = 0x9000, scoped, tag = 'internal scratch']
  %s0 = inlined_call_operand.vmem [shape: f32[16,256], index: 0, kind: input, shape index: {}]
  %s1 = inlined_call_operand.vmem [shape: f32[64,16], index: 1, kind: input, shape index: {}]
  %s2 = inlined_call_operand.vmem [shape: f32[64,4], index: 2, kind: input, shape index: {}]
  %s3 = inlined_call_operand.vmem [shape: f32[128,2], index: 3, kind: output, shape index: {}]
  %s4 = sld [smem:[#allocation0]]
  $region87: #{tpu_custom_call.1} parent=0
    _
  %s6 = ssub.s32 1, %s4
  %s7 = scalar_select 0, %s6, %s4
  $region1: #{tpu_custom_call.1} parent=0
    #allocation2 [shape = 'u8[16384]{0}', space=vmem, size = 0x4000, scoped, tag = 'input window, operand 0']
    loop: start=0, step=1, limit=4
    $region2: #{tpu_custom_call.1} parent=1 // loop_pre_header
      _
    $region3: #{tpu_custom_call.1} parent=1 // loop_header
      %s9 = sphi 0, %s13
      %p10 = scmp.ge.s32.totalorder %s9, 4
      %s16 = sphi 0, %s28
      %s17 = sphi 0, %s24
      %s18 = sphi 0, %s16
      %s19 = sphi 0, %s17
      %s20 = sphi 0, %s18
      %s21 = sphi 0, %s19
      %s33 = sphi 0, %s35
      %s36 = sphi 0, %s33
      %s37 = sphi 0, %s36
      %s53 = sphi 0, %s37
      %s57 = sphi 0, %s57
      %s59 = sphi 0, %s57
      %s60 = sphi 0, %s59
      %s74 = sphi 0, %s60
      %s78 = sphi 0, %s78
      %s80 = sphi 0, %s78
      %s81 = sphi 0, %s80
      %s95 = sphi 0, %s81
      %s101 = sphi 0, %s103
      %s104 = sphi 0, %s101
      %s105 = sphi 0, %s104
      %s121 = sphi 0, %s105
    $region4: #{tpu_custom_call.1} parent=1 // loop_header_branch
      %12 = sbr.rel (%p10) target = $region8
    $region5: #{tpu_custom_call.1} parent=1 // loop_body
      %s14 = ssub.s32 %s9, 1
      %s15 = ssub.s32 %s9, 2
      %s22 = sadd.s32 1, %s17
      %p23 = scmp.ge.s32.totalorder %s22, 1
      %s24 = scalar_select %p23, 0, %s22
      %s25 = sadd.s32 1, %s16
      %s26 = scalar_select %p23, %s25, %s16
      %p27 = scmp.ge.s32.totalorder %s26, 2
      %s28 = scalar_select %p27, 0, %s26
      %s29 = sadd.s32 %s16, %s17
      %s30 = sadd.s32 %s28, %s24
      %s31 = ssub.s32 %s29, %s30
      %p32 = scmp.eq.s32.totalorder %s31, 0
      %s34 = sadd.s32 %s33, 1
      %s35 = scalar_select %p32, %s33, %s34
      %p38 = pneg %p32
      %p39 = scmp.eq.s32.totalorder %s9, 1
      %p40 = por %p38, %p39
      %p41 = scmp.ne.s32.totalorder %s33, %s36
      %p42 = scmp.eq.s32.totalorder %s9, 0
      %p43 = por %p41, %p42
      %p44 = scmp.ne.s32.totalorder %s33, %s36
      %p45 = scmp.eq.s32.totalorder %s14, 1
      %p46 = por %p44, %p45
      %p47 = scmp.ne.s32.totalorder %s36, %s37
      %p48 = scmp.eq.s32.totalorder %s14, 0
      %p49 = por %p47, %p48
      %p50 = scmp.ne.s32.totalorder %s36, %s37
      %p51 = scmp.eq.s32.totalorder %s15, 1
      %p52 = por %p50, %p51
      %p54 = scmp.ne.s32.totalorder %s37, %s53
      %p55 = scmp.eq.s32.totalorder %s15, 0
      %p56 = por %p54, %p55
      %s58 = sadd.s32 %s57, 1
      %p61 = scmp.eq.s32.totalorder %s9, 1
      %p62 = scmp.ne.s32.totalorder %s57, %s59
      %p63 = scmp.eq.s32.totalorder %s9, 0
      %p64 = por %p62, %p63
      %p65 = scmp.ne.s32.totalorder %s57, %s59
      %p66 = scmp.eq.s32.totalorder %s14, 1
      %p67 = por %p65, %p66
      %p68 = scmp.ne.s32.totalorder %s59, %s60
      %p69 = scmp.eq.s32.totalorder %s14, 0
      %p70 = por %p68, %p69
      %p71 = scmp.ne.s32.totalorder %s59, %s60
      %p72 = scmp.eq.s32.totalorder %s15, 1
      %p73 = por %p71, %p72
      %p75 = scmp.ne.s32.totalorder %s60, %s74
      %p76 = scmp.eq.s32.totalorder %s15, 0
      %p77 = por %p75, %p76
      %s79 = sadd.s32 %s78, 1
      %p82 = scmp.eq.s32.totalorder %s9, 1
      %p83 = scmp.ne.s32.totalorder %s78, %s80
      %p84 = scmp.eq.s32.totalorder %s9, 0
      %p85 = por %p83, %p84
      %p86 = scmp.ne.s32.totalorder %s78, %s80
      %p87 = scmp.eq.s32.totalorder %s14, 1
      %p88 = por %p86, %p87
      %p89 = scmp.ne.s32.totalorder %s80, %s81
      %p90 = scmp.eq.s32.totalorder %s14, 0
      %p91 = por %p89, %p90
      %p92 = scmp.ne.s32.totalorder %s80, %s81
      %p93 = scmp.eq.s32.totalorder %s15, 1
      %p94 = por %p92, %p93
      %p96 = scmp.ne.s32.totalorder %s81, %s95
      %p97 = scmp.eq.s32.totalorder %s15, 0
      %p98 = por %p96, %p97
      %s99 = ssub.s32 %s16, %s28
      %p100 = scmp.eq.s32.totalorder %s99, 0
      %s102 = sadd.s32 %s101, 1
      %s103 = scalar_select %p100, %s101, %s102
      %p106 = pneg %p100
      %p107 = scmp.eq.s32.totalorder %s9, 1
      %p108 = por %p106, %p107
      %p109 = scmp.ne.s32.totalorder %s101, %s104
      %p110 = scmp.eq.s32.totalorder %s9, 0
      %p111 = por %p109, %p110
      %p112 = scmp.ne.s32.totalorder %s101, %s104
      %p113 = scmp.eq.s32.totalorder %s14, 1
      %p114 = por %p112, %p113
      %p115 = scmp.ne.s32.totalorder %s104, %s105
      %p116 = scmp.eq.s32.totalorder %s14, 0
      %p117 = por %p115, %p116
      %p118 = scmp.ne.s32.totalorder %s104, %s105
      %p119 = scmp.eq.s32.totalorder %s15, 1
      %p120 = por %p118, %p119
      %p122 = scmp.ne.s32.totalorder %s105, %s121
      %p123 = scmp.eq.s32.totalorder %s15, 0
      %p124 = por %p122, %p123
      %p125 = scmp.le.s32.totalorder 1, %s9
      %p126 = scmp.lt.s32.totalorder %s9, 3
      %p127 = pnand %p125, %p126
      %p128 = pneg %p127
      // Predicated region
      $region9: #{tpu_custom_call.1} parent=5 // pred_check
        _
      $region10: #{tpu_custom_call.1} parent=5 // pred_check_branch
        %130 = sbr.rel (%p127) target = $region12
      $region11: #{tpu_custom_call.1} parent=5 // pred_region
        %s131 = ssub.s32 %s9, 1
        // Predicated region
        $region13: #{tpu_custom_call.1} parent=11 // pred_check
          %p132 = pneg %p70
        $region14: #{tpu_custom_call.1} parent=11 // pred_check_branch
          %134 = sbr.rel (%p132) target = $region16
        $region15: #{tpu_custom_call.1} parent=11 // pred_region
          _
        $region16: #{tpu_custom_call.1} parent=11 // pred_fallthru
          _
        // Predicated region
        $region17: #{tpu_custom_call.1} parent=11 // pred_check
          %p135 = pneg %p91
        $region18: #{tpu_custom_call.1} parent=11 // pred_check_branch
          %137 = sbr.rel (%p135) target = $region20
        $region19: #{tpu_custom_call.1} parent=11 // pred_region
          _
        $region20: #{tpu_custom_call.1} parent=11 // pred_fallthru
          _
      $region12: #{tpu_custom_call.1} parent=5 // pred_fallthru
        _
      %p138 = scmp.lt.s32.totalorder %s9, 2
      // Predicated region
      $region21: #{tpu_custom_call.1} parent=5 // pred_check
        %p139 = pneg %p138
      $region22: #{tpu_custom_call.1} parent=5 // pred_check_branch
        %141 = sbr.rel (%p139) target = $region24
      $region23: #{tpu_custom_call.1} parent=5 // pred_region
        // Predicated region
        $region25: #{tpu_custom_call.1} parent=23 // pred_check
          %p142 = pneg %p43
        $region26: #{tpu_custom_call.1} parent=23 // pred_check_branch
          %144 = sbr.rel (%p142) target = $region28
        $region27: #{tpu_custom_call.1} parent=23 // pred_region
          %s145 = sand.u32 %s33, 1
          %s146 = sand.u32 %s33, 1
          %s147 = smul.addr %s146, 16
          %s148 = scalar_lea.vmem [#allocation2], %s147
          %s149 = sadd.s32 %s16, %s17
          %s150 = smul.addr %s149, 8
          %s151 = scalar_lea.vmem %s0, %s150
          // Predicated region
          $region29: #{tpu_custom_call.1} parent=27 // pred_check
            _
          $region30: #{tpu_custom_call.1} parent=27 // pred_check_branch
            %153 = sbr.rel (0) target = $region32
          $region31: #{tpu_custom_call.1} parent=27 // pred_region
            // Predicated region
            $region33: #{tpu_custom_call.1} parent=31 // pred_check
              _
            $region34: #{tpu_custom_call.1} parent=31 // pred_check_branch
              %155 = sbr.rel (0) target = $region36
            $region35: #{tpu_custom_call.1} parent=31 // pred_region
              // Predicated region
              $region48: #{tpu_custom_call.1} parent=35 // pred_check
                _
              $region49: #{tpu_custom_call.1} parent=35 // pred_check_branch
                %173 = sbr.rel (0) target = $region51
              $region50: #{tpu_custom_call.1} parent=35 // pred_region
                loop: start=0, step=1, limit=1
                $region52: #{tpu_custom_call.1} parent=50 // loop_pre_header
                  _
                $region53: #{tpu_custom_call.1} parent=50 // loop_header
                  %s175 = sphi 0, %s179
                  %p176 = scmp.ge.s32.totalorder %s175, 1
                  %s180 = sphi %s151, %s151
                  %s181 = sphi %s148, %s148
                $region54: #{tpu_custom_call.1} parent=50 // loop_header_branch
                  %178 = sbr.rel (%p176) target = $region58
                $region55: #{tpu_custom_call.1} parent=50 // loop_body
                  %v182 = vld [vmem:[%s180] sm:$0xff]
                  %183 = vst [vmem:[%s181] sm:$0xff] %v182
                  %v184 = vld [vmem:[%s180 + $0x10] sm:$0xff]
                  %185 = vst [vmem:[%s181 + $0x8] sm:$0xff] %v184
                $region56: #{tpu_custom_call.1} parent=50 // loop_footer
                  %s179 = sadd.s32 1, %s175
                $region57: #{tpu_custom_call.1} parent=50 // loop_footer_branch
                  %174 = sbr.rel target = $region53
                $region58: #{tpu_custom_call.1} parent=50 // loop_exit
                  _
              $region51: #{tpu_custom_call.1} parent=35 // pred_fallthru
                _
              // Predicated region
              $region59: #{tpu_custom_call.1} parent=35 // pred_check
                _
              $region60: #{tpu_custom_call.1} parent=35 // pred_check_branch
                %187 = sbr.rel target = $region62
              $region61: #{tpu_custom_call.1} parent=35 // pred_region
                _
              $region62: #{tpu_custom_call.1} parent=35 // pred_fallthru
                _
            $region36: #{tpu_custom_call.1} parent=31 // pred_fallthru
              _
            // Predicated region
            $region37: #{tpu_custom_call.1} parent=31 // pred_check
              _
            $region38: #{tpu_custom_call.1} parent=31 // pred_check_branch
              %157 = sbr.rel target = $region40
            $region39: #{tpu_custom_call.1} parent=31 // pred_region
              %s159 = ssub.s32 256, 1
              loop: start=0, step=1, limit=1
              $region41: #{tpu_custom_call.1} parent=39 // loop_pre_header
                _
              $region42: #{tpu_custom_call.1} parent=39 // loop_header
                %s161 = sphi 0, %s165
                %p162 = scmp.ge.s32.totalorder %s161, 1
                %s166 = sphi %s151, %s151
                %s167 = sphi %s148, %s148
              $region43: #{tpu_custom_call.1} parent=39 // loop_header_branch
                %164 = sbr.rel (%p162) target = $region47
              $region44: #{tpu_custom_call.1} parent=39 // loop_body
                %v168 = vld [vmem:[%s166] sm:%s159]
                %169 = vst [vmem:[%s167] sm:%s159] %v168
                %v170 = vld [vmem:[%s166 + $0x10] sm:%s159]
                %171 = vst [vmem:[%s167 + $0x8] sm:%s159] %v170
              $region45: #{tpu_custom_call.1} parent=39 // loop_footer
                %s165 = sadd.s32 1, %s161
              $region46: #{tpu_custom_call.1} parent=39 // loop_footer_branch
                %160 = sbr.rel target = $region42
              $region47: #{tpu_custom_call.1} parent=39 // loop_exit
                _
            $region40: #{tpu_custom_call.1} parent=31 // pred_fallthru
              _
          $region32: #{tpu_custom_call.1} parent=27 // pred_fallthru
            _
          %188 = vnop
        $region28: #{tpu_custom_call.1} parent=23 // pred_fallthru
          _
      $region24: #{tpu_custom_call.1} parent=5 // pred_fallthru
        _
      %p189 = scmp.le.s32.totalorder 1, %s9
      %p190 = scmp.lt.s32.totalorder %s9, 3
      %p191 = pnand %p189, %p190
      %p192 = pneg %p191
      // Predicated region
      $region63: #{tpu_custom_call.1} parent=5 // pred_check
        _
      $region64: #{tpu_custom_call.1} parent=5 // pred_check_branch
        %194 = sbr.rel (%p191) target = $region66
      $region65: #{tpu_custom_call.1} parent=5 // pred_region
        %s195 = ssub.s32 %s9, 1
        %s196 = sand.u32 %s36, 1
        %s197 = sand.u32 %s36, 1
        %s198 = smul.addr %s197, 16
        %s199 = scalar_lea.vmem [#allocation2], %s198
        // Predicated region
        $region67: #{tpu_custom_call.1} parent=65 // pred_check
          %p200 = pneg %p49
        $region68: #{tpu_custom_call.1} parent=65 // pred_check_branch
          %202 = sbr.rel (%p200) target = $region70
        $region69: #{tpu_custom_call.1} parent=65 // pred_region
          _
        $region70: #{tpu_custom_call.1} parent=65 // pred_fallthru
          _
        %s203 = sand.u32 %s36, 1
        %s204 = sand.u32 %s36, 1
        %s205 = smul.addr %s204, 16
        %s206 = scalar_lea.vmem [#allocation2], %s205
        %p207 = pneg %p49
        %p208 = pneg %p46
        %p209 = pneg %p70
        %p210 = pneg %p67
        %p211 = pneg %p91
        %p212 = pneg %p88
        %p213 = pneg %p117
        %p214 = pneg %p114
        %s215 = smul.u32 8, %s18
        %p216 = scmp.lt.s32.totalorder %s215, 15
        %s217 = scalar_select %p216, %s215, 15
        %s218 = smul.addr %s217, 8
        %s219 = scalar_lea.vmem %s3, %s218
        %s220 = sadd.s32 %s18, %s19
        %s221 = smul.u32 8, %s18
        %p222 = scmp.lt.s32.totalorder %s221, 15
        %s223 = scalar_select %p222, %s221, 15
        %s224 = smul.addr %s223, 8
        %s225 = scalar_lea.vmem %s3, %s224
        %s226 = smul.u32 8, %s18
        %v227 = vld [vmem:[%s1] sm:$0xff]
        %v228 = vld [vmem:[%s1 + $0x8] sm:$0xff]
        %v229 = vld [vmem:[%s1 + $0x10] sm:$0xff]
        %v230 = vld [vmem:[%s1 + $0x18] sm:$0xff]
        %v231 = vld [vmem:[%s1 + $0x20] sm:$0xff]
        %v232 = vld [vmem:[%s1 + $0x28] sm:$0xff]
        %v233 = vld [vmem:[%s1 + $0x30] sm:$0xff]
        %v234 = vld [vmem:[%s1 + $0x38] sm:$0xff]
        %v235 = vld [vmem:[%s199] sm:$0xff]
        %v236 = vld [vmem:[%s199 + $0x8] sm:$0xff]
        %v237 = vld [vmem:[%s2] sm:$0xff]
        %v238 = vld [vmem:[%s2 + $0x8] sm:$0xff]
        %v239 = vld [vmem:[%s2 + $0x10] sm:$0xff]
        %v240 = vld [vmem:[%s2 + $0x18] sm:$0xff]
        %v241 = vld [vmem:[%s2 + $0x20] sm:$0xff]
        %v242 = vld [vmem:[%s2 + $0x28] sm:$0xff]
        %v243 = vld [vmem:[%s2 + $0x30] sm:$0xff]
        %v244 = vld [vmem:[%s2 + $0x38] sm:$0xff]
        %246 = vset.pattern.permute.xlu0 0
        %247 = vperm.xlu0 %246, %v237
        %v248 = vpop.permute.xlu0 %247
        %251 = vset.pattern.permute.xlu0 0
        %252 = vperm.xlu0 %251, %v238
        %v253 = vpop.permute.xlu0 %252
        %256 = vset.pattern.permute.xlu0 0
        %257 = vperm.xlu0 %256, %v239
        %v258 = vpop.permute.xlu0 %257
        %261 = vset.pattern.permute.xlu0 0
        %262 = vperm.xlu0 %261, %v240
        %v263 = vpop.permute.xlu0 %262
        %266 = vset.pattern.permute.xlu0 0
        %267 = vperm.xlu0 %266, %v241
        %v268 = vpop.permute.xlu0 %267
        %271 = vset.pattern.permute.xlu0 0
        %272 = vperm.xlu0 %271, %v242
        %v273 = vpop.permute.xlu0 %272
        %276 = vset.pattern.permute.xlu0 0
        %277 = vperm.xlu0 %276, %v243
        %v278 = vpop.permute.xlu0 %277
        %281 = vset.pattern.permute.xlu0 0
        %282 = vperm.xlu0 %281, %v244
        %v283 = vpop.permute.xlu0 %282
        %vm285 = vcmask 130048
        %v287 = vsel %vm285, %v227, 0
        %v290 = vsel %vm285, %v228, 0
        %v293 = vsel %vm285, %v229, 0
        %v296 = vsel %vm285, %v230, 0
        %v299 = vsel %vm285, %v231, 0
        %v302 = vsel %vm285, %v232, 0
        %v305 = vsel %vm285, %v233, 0
        %v308 = vsel %vm285, %v234, 0
        %310 = vmatpush.msra.mxu0 0.0
        %311 = vmatpush.msra.mxu0 0.0
        %312 = vmatpush.msra.mxu0 0.0
        %313 = vmatpush.msra.mxu0 0.0
        %314 = vmatpush.msra.mxu0 0.0
        %315 = vmatpush.msra.mxu0 0.0
        %316 = vmatpush.msra.mxu0 0.0
        %317 = vmatpush.msra.mxu0 0.0
        %318 = vmatpush.msra.mxu0 0.0
        %319 = vmatpush.msra.mxu0 0.0
        %320 = vmatpush.msra.mxu0 0.0
        %321 = vmatpush.msra.mxu0 0.0
        %322 = vmatpush.msra.mxu0 0.0
        %323 = vmatpush.msra.mxu0 0.0
        %324 = vmatpush.msra.mxu0 %v236
        %325 = vmatpush.msra.mxu0 %v235
        %326 = vmatmul.f32.gmra.mxu0 %v287
        %v327 = vpop.f32.mrf.mxu0
        %v328 = vadd.f32 %v248, %v327
        %329 = vmatmul.f32.gmra.mxu0 %v290
        %v330 = vpop.f32.mrf.mxu0
        %v331 = vadd.f32 %v253, %v330
        %332 = vmatmul.f32.gmra.mxu0 %v293
        %v333 = vpop.f32.mrf.mxu0
        %v334 = vadd.f32 %v258, %v333
        %335 = vmatmul.f32.gmra.mxu0 %v296
        %v336 = vpop.f32.mrf.mxu0
        %v337 = vadd.f32 %v263, %v336
        %338 = vmatmul.f32.gmra.mxu0 %v299
        %v339 = vpop.f32.mrf.mxu0
        %v340 = vadd.f32 %v268, %v339
        %341 = vmatmul.f32.gmra.mxu0 %v302
        %v342 = vpop.f32.mrf.mxu0
        %v343 = vadd.f32 %v273, %v342
        %344 = vmatmul.f32.gmra.mxu0 %v305
        %v345 = vpop.f32.mrf.mxu0
        %v346 = vadd.f32 %v278, %v345
        %347 = vmatmul.f32.gmra.mxu0 %v308
        %v348 = vpop.f32.mrf.mxu0
        %v349 = vadd.f32 %v283, %v348
        %350 = vdwg.mxu0
        %v351 = vmax.f32 %v328, 0.0
        %v352 = vmax.f32 %v331, 0.0
        %v353 = vmax.f32 %v334, 0.0
        %v354 = vmax.f32 %v337, 0.0
        %v355 = vmax.f32 %v340, 0.0
        %v356 = vmax.f32 %v343, 0.0
        %v357 = vmax.f32 %v346, 0.0
        %v358 = vmax.f32 %v349, 0.0
        %s359 = sadd.s32 %s18, %s19
        %s360 = smul.u32 %s359, 128
        %v361 = vlaneseq
        %v362 = vand.u32 %v361, 127
        %v363 = vstv %s360
        %v364 = vadd.s32 %v363, %v362
        %vm365 = vcmp.lt.s32.totalorder %v364, 8
        %v366 = vsel %vm365, 1, 0
        %vm367 = vcmp.eq.s32.totalorder %v366, 1
        %v368 = vsel %vm367, %v351, 0.0
        %v369 = vsel %vm367, %v352, 0.0
        %v370 = vsel %vm367, %v353, 0.0
        %v371 = vsel %vm367, %v354, 0.0
        %v372 = vsel %vm367, %v355, 0.0
        %v373 = vsel %vm367, %v356, 0.0
        %v374 = vsel %vm367, %v357, 0.0
        %v375 = vsel %vm367, %v358, 0.0
        %376 = vadd.xlane.f32.xlu0 %v368
        %v377 = vpop.xlane.xlu0 %376
        %378 = vadd.xlane.f32.xlu0 %v369
        %v379 = vpop.xlane.xlu0 %378
        %380 = vadd.xlane.f32.xlu0 %v370
        %v381 = vpop.xlane.xlu0 %380
        %382 = vadd.xlane.f32.xlu0 %v371
        %v383 = vpop.xlane.xlu0 %382
        %384 = vadd.xlane.f32.xlu0 %v372
        %v385 = vpop.xlane.xlu0 %384
        %386 = vadd.xlane.f32.xlu0 %v373
        %v387 = vpop.xlane.xlu0 %386
        %388 = vadd.xlane.f32.xlu0 %v374
        %v389 = vpop.xlane.xlu0 %388
        %390 = vadd.xlane.f32.xlu0 %v375
        %v391 = vpop.xlane.xlu0 %390
        %v392 = vmul.f32 %v368, %v368
        %v393 = vmul.f32 %v369, %v369
        %v394 = vmul.f32 %v370, %v370
        %v395 = vmul.f32 %v371, %v371
        %v396 = vmul.f32 %v372, %v372
        %v397 = vmul.f32 %v373, %v373
        %v398 = vmul.f32 %v374, %v374
        %v399 = vmul.f32 %v375, %v375
        %400 = vadd.xlane.f32.xlu0 %v392
        %v401 = vpop.xlane.xlu0 %400
        %402 = vadd.xlane.f32.xlu0 %v393
        %v403 = vpop.xlane.xlu0 %402
        %404 = vadd.xlane.f32.xlu0 %v394
        %v405 = vpop.xlane.xlu0 %404
        %406 = vadd.xlane.f32.xlu0 %v395
        %v407 = vpop.xlane.xlu0 %406
        %408 = vadd.xlane.f32.xlu0 %v396
        %v409 = vpop.xlane.xlu0 %408
        %410 = vadd.xlane.f32.xlu0 %v397
        %v411 = vpop.xlane.xlu0 %410
        %412 = vadd.xlane.f32.xlu0 %v398
        %v413 = vpop.xlane.xlu0 %412
        %414 = vadd.xlane.f32.xlu0 %v399
        %v415 = vpop.xlane.xlu0 %414
        %vm416 = vcmask 7168
        %v417 = vsel %vm416, %v377, %v401
        %v418 = vsel %vm416, %v379, %v403
        %v419 = vsel %vm416, %v381, %v405
        %v420 = vsel %vm416, %v383, %v407
        %v421 = vsel %vm416, %v385, %v409
        %v422 = vsel %vm416, %v387, %v411
        %v423 = vsel %vm416, %v389, %v413
        %v424 = vsel %vm416, %v391, %v415
        %p425 = scmp.eq.s32.totalorder %s19, 0
        // Predicated region
        $region71: #{tpu_custom_call.1} parent=65 // pred_check
          %p426 = pneg %p425
        $region72: #{tpu_custom_call.1} parent=65 // pred_check_branch
          %428 = sbr.rel (%p426) target = $region74
        $region73: #{tpu_custom_call.1} parent=65 // pred_region
          %vm429 = vcmask 15360
          %430 = vst.msk [vmem:[%s225] sm:$0xff] %vm429, 0.0
          %431 = vst.msk [vmem:[%s225 + $0x8] sm:$0xff] %vm429, 0.0
          %432 = vst.msk [vmem:[%s225 + $0x10] sm:$0xff] %vm429, 0.0
          %433 = vst.msk [vmem:[%s225 + $0x18] sm:$0xff] %vm429, 0.0
          %434 = vst.msk [vmem:[%s225 + $0x20] sm:$0xff] %vm429, 0.0
          %435 = vst.msk [vmem:[%s225 + $0x28] sm:$0xff] %vm429, 0.0
          %436 = vst.msk [vmem:[%s225 + $0x30] sm:$0xff] %vm429, 0.0
          %437 = vst.msk [vmem:[%s225 + $0x38] sm:$0xff] %vm429, 0.0
        $region74: #{tpu_custom_call.1} parent=65 // pred_fallthru
          _
        %v438 = vld [vmem:[%s225] sm:$0xff]
        %v439 = vld [vmem:[%s225 + $0x8] sm:$0xff]
        %v440 = vld [vmem:[%s225 + $0x10] sm:$0xff]
        %v441 = vld [vmem:[%s225 + $0x18] sm:$0xff]
        %v442 = vld [vmem:[%s225 + $0x20] sm:$0xff]
        %v443 = vld [vmem:[%s225 + $0x28] sm:$0xff]
        %v444 = vld [vmem:[%s225 + $0x30] sm:$0xff]
        %v445 = vld [vmem:[%s225 + $0x38] sm:$0xff]
        %v446 = vadd.f32 %v438, %v417
        %v447 = vadd.f32 %v439, %v418
        %v448 = vadd.f32 %v440, %v419
        %v449 = vadd.f32 %v441, %v420
        %v450 = vadd.f32 %v442, %v421
        %v451 = vadd.f32 %v443, %v422
        %v452 = vadd.f32 %v444, %v423
        %v453 = vadd.f32 %v445, %v424
        %vm454 = vcmask 15360
        %455 = vst.msk [vmem:[%s225] sm:$0xff] %vm454, %v446
        %456 = vst.msk [vmem:[%s225 + $0x8] sm:$0xff] %vm454, %v447
        %457 = vst.msk [vmem:[%s225 + $0x10] sm:$0xff] %vm454, %v448
        %458 = vst.msk [vmem:[%s225 + $0x18] sm:$0xff] %vm454, %v449
        %459 = vst.msk [vmem:[%s225 + $0x20] sm:$0xff] %vm454, %v450
        %460 = vst.msk [vmem:[%s225 + $0x28] sm:$0xff] %vm454, %v451
        %461 = vst.msk [vmem:[%s225 + $0x30] sm:$0xff] %vm454, %v452
        %462 = vst.msk [vmem:[%s225 + $0x38] sm:$0xff] %vm454, %v453
        %s463 = smul.u32 8, %s18
        %p464 = scmp.lt.s32.totalorder %s463, 15
        %s465 = scalar_select %p464, %s463, 15
        %s466 = smul.addr %s465, 8
        %s467 = scalar_lea.vmem %s3, %s466
        // Predicated region
        $region75: #{tpu_custom_call.1} parent=65 // pred_check
          %p468 = pneg %p114
        $region76: #{tpu_custom_call.1} parent=65 // pred_check_branch
          %470 = sbr.rel (%p468) target = $region78
        $region77: #{tpu_custom_call.1} parent=65 // pred_region
          %s471 = smul.u32 8, %s18
        $region78: #{tpu_custom_call.1} parent=65 // pred_fallthru
          _
      $region66: #{tpu_custom_call.1} parent=5 // pred_fallthru
        _
      %p472 = scmp.le.s32.totalorder 2, %s9
      // Predicated region
      $region79: #{tpu_custom_call.1} parent=5 // pred_check
        %p473 = pneg %p472
      $region80: #{tpu_custom_call.1} parent=5 // pred_check_branch
        %475 = sbr.rel (%p473) target = $region82
      $region81: #{tpu_custom_call.1} parent=5 // pred_region
        %s476 = ssub.s32 %s9, 2
        // Predicated region
        $region83: #{tpu_custom_call.1} parent=81 // pred_check
          %p477 = pneg %p120
        $region84: #{tpu_custom_call.1} parent=81 // pred_check_branch
          %479 = sbr.rel (%p477) target = $region86
        $region85: #{tpu_custom_call.1} parent=81 // pred_region
          %s480 = smul.u32 8, %s20
          %p481 = scmp.lt.s32.totalorder %s480, 15
          %s482 = scalar_select %p481, %s480, 15
          %s483 = smul.addr %s482, 8
          %s484 = scalar_lea.vmem %s3, %s483
        $region86: #{tpu_custom_call.1} parent=81 // pred_fallthru
          _
      $region82: #{tpu_custom_call.1} parent=5 // pred_fallthru
        _
    $region6: #{tpu_custom_call.1} parent=1 // loop_footer
      %s13 = sadd.s32 1, %s9
    $region7: #{tpu_custom_call.1} parent=1 // loop_footer_branch
      %8 = sbr.rel target = $region3
    $region8: #{tpu_custom_call.1} parent=1 // loop_exit
      _

</llo_original>
